<compile_context>
chip_gen: v7x
topology: tpu7x:2x2x1
jax: 0.10.0
libtpu: 0.0.40
codegen_flags: <defaults>
</compile_context>

<pallas_src>
import functools

import jax
import jax.numpy as jnp
from jax.experimental import pallas as pl
from jax.experimental.pallas import tpu as pltpu


def _round_up(n, m):
    return (n + m - 1) // m * m


def _fused_mlp_kernel(*refs):
    """refs = (x_ref, w0_ref, b0_ref, w1_ref, b1_ref, ..., o_ref).

    Computes, per batch tile, the full layer stack:
        h = x
        for each layer: h = (tanh(h @ W + b) + 1) / 2
    Matmuls run on the MXU in the operand dtype (bf16) with f32 accumulation;
    the bias/tanh epilogue is f32. Intermediates stay in vregs.
    """
    x_ref = refs[0]
    o_ref = refs[-1]
    layer_refs = refs[1:-1]
    n_layers = len(layer_refs) // 2

    h = x_ref[...]  # (TB, K0p) in compute dtype (bf16)
    for li in range(n_layers):
        w_ref = layer_refs[2 * li]
        b_ref = layer_refs[2 * li + 1]
        acc = jnp.dot(h, w_ref[...], preferred_element_type=jnp.float32)
        acc = acc + b_ref[...].astype(jnp.float32)        # (1, Np) broadcasts
        act = (jnp.tanh(acc) + 1.0) * 0.5                 # f32 epilogue
        if li < n_layers - 1:
            h = act.astype(w_ref.dtype)                   # bf16 feed to next MXU pass
        else:
            o_ref[...] = act.astype(o_ref.dtype)


@functools.partial(jax.jit, static_argnames=("compute_dtype",))
def dense_layer_a_forward(x, params, compute_dtype=jnp.bfloat16):
    """x: (B, C0); params: list of (W(i): (Cin, Cout), b(i): (Cout,)) -> (B, C_last)."""
    B, C0 = x.shape
    dims = [C0] + [w.shape[1] for (w, _) in params]
    pdims = [_round_up(max(d, 128), 128) for d in dims]   # lane-dense everywhere

    # Batch tiling: big batches get 256-row tiles (pipelined + v7x core-parallel);
    # small batches use a single 8-aligned tile.
    TB = 256 if B >= 256 else _round_up(B, 8)
    Bp = _round_up(B, TB)
    grid = (Bp // TB,)

    # Padded, bf16 input activation.
    x_p = jnp.zeros((Bp, pdims[0]), compute_dtype)
    x_p = x_p.at[:B, :C0].set(x.astype(compute_dtype))

    inputs = [x_p]
    in_specs = [pl.BlockSpec((TB, pdims[0]), lambda i: (i, 0))]

    for li, (w, b) in enumerate(params):
        cin, cout = w.shape
        kp, np_ = pdims[li], pdims[li + 1]
        w_p = jnp.zeros((kp, np_), compute_dtype).at[:cin, :cout].set(
            w.astype(compute_dtype))
        b_p = jnp.zeros((1, np_), jnp.float32).at[0, :cout].set(
            b.astype(jnp.float32))
        inputs.extend([w_p, b_p])
        in_specs.extend([
            pl.BlockSpec((kp, np_), lambda i: (0, 0)),    # weights resident per step
            pl.BlockSpec((1, np_), lambda i: (0, 0)),
        ])

    out_p = pl.pallas_call(
        _fused_mlp_kernel,
        out_shape=jax.ShapeDtypeStruct((Bp, pdims[-1]), x.dtype),
        grid=grid,
        in_specs=in_specs,
        out_specs=pl.BlockSpec((TB, pdims[-1]), lambda i: (i, 0)),
        compiler_params=pltpu.CompilerParams(
            dimension_semantics=("parallel",),            # batch axis: megacore-friendly
            vmem_limit_bytes=64 * 1024 * 1024,            # explicit; fits v7x's 64 MiB
        ),
    )(*inputs)

    # Slice away batch + lane padding.
    return out_p[:B, :dims[-1]]


def init_dense_layer_a_params(key, channel_list, dtype=jnp.float32):
    """Deterministic params mimicking nn.Linear init (uniform(-1/sqrt(fan_in), ...))."""
    params = []
    for i in range(len(channel_list) - 1):
        cin, cout = channel_list[i], channel_list[i + 1]
        key, kw, kb = jax.random.split(key, 3)
        bound = 1.0 / float(jnp.sqrt(jnp.array(cin, dtype=jnp.float32)))
        # stored as (in, out) so the kernel does x @ W directly
        w = jax.random.uniform(kw, (cin, cout), dtype=dtype, minval=-bound, maxval=bound)
        b = jax.random.uniform(kb, (cout,), dtype=dtype, minval=-bound, maxval=bound)
        params.append((w, b))
    return params


def _reference_forward(x, params, compute_dtype=jnp.bfloat16):
    """Plain-JAX reference with identical dtype handling to the kernel."""
    h = x.astype(compute_dtype)
    n = len(params)
    for li, (w, b) in enumerate(params):
        acc = jnp.dot(h, w.astype(compute_dtype),
                      preferred_element_type=jnp.float32)
        acc = acc + b.astype(jnp.float32)
        act = (jnp.tanh(acc) + 1.0) * 0.5
        h = act.astype(compute_dtype) if li < n - 1 else act.astype(x.dtype)
    return h


if __name__ == "__main__":
    key = jax.random.PRNGKey(0)

    # Small, MLP-style shapes implied by the module: x is (batch, channel_list[0]).
    channel_list = [32, 64, 16]
    batch = 8

    key, kx, kp = jax.random.split(key, 3)
    x = jax.random.normal(kx, (batch, channel_list[0]), dtype=jnp.float32)
    params = init_dense_layer_a_params(kp, channel_list)

    out = dense_layer_a_forward(x, params)
    out = jax.block_until_ready(out)

    # Sanity: output is in (0, 1) because of (tanh(.)+1)/2, and shape matches.
    assert out.shape == (batch, channel_list[-1])
    assert bool(jnp.all(out >= 0.0)) and bool(jnp.all(out <= 1.0))

    # Reference check against plain-JAX math with the same bf16/f32 policy.
    ref = _reference_forward(x, params)
    assert bool(jnp.allclose(out, ref, atol=2e-4, rtol=2e-4)), (
        float(jnp.max(jnp.abs(out - ref))))

    print("KERNEL_OK")
</pallas_src>

<mosaic_0001>
module attributes {stable_mosaic.version = 11 : i64} {
  func.func @_fused_mlp_kernel(%arg0: i32, %arg1: memref<8x128xbf16, #tpu.memory_space<vmem>>, %arg2: memref<128x128xbf16, #tpu.memory_space<vmem>>, %arg3: memref<1x128xf32, #tpu.memory_space<vmem>>, %arg4: memref<128x128xbf16, #tpu.memory_space<vmem>>, %arg5: memref<1x128xf32, #tpu.memory_space<vmem>>, %arg6: memref<8x128xf32, #tpu.memory_space<vmem>>) attributes {dimension_semantics = [#tpu.dimension_semantics<parallel>], iteration_bounds = array<i64: 1>, scalar_prefetch = 0 : i64, scratch_operands = 0 : i64, tpu.core_type = #tpu.core_type<tc>, window_params = [{transform_indices = @transform_0, window_bounds = array<i64: 8, 128>}, {pipeline_mode = #tpu.pipeline_mode<synchronous>, transform_indices = @transform_1, window_bounds = array<i64: 128, 128>}, {pipeline_mode = #tpu.pipeline_mode<synchronous>, transform_indices = @transform_2, window_bounds = array<i64: 1, 128>}, {pipeline_mode = #tpu.pipeline_mode<synchronous>, transform_indices = @transform_3, window_bounds = array<i64: 128, 128>}, {pipeline_mode = #tpu.pipeline_mode<synchronous>, transform_indices = @transform_4, window_bounds = array<i64: 1, 128>}, {transform_indices = @transform_5, window_bounds = array<i64: 8, 128>}]} {
    %c0 = arith.constant 0 : index
    %c0_0 = arith.constant 0 : index
    %0 = vector.load %arg1[%c0, %c0_0] : memref<8x128xbf16, #tpu.memory_space<vmem>>, vector<8x128xbf16>
    %c0_1 = arith.constant 0 : index
    %c0_2 = arith.constant 0 : index
    %1 = vector.load %arg2[%c0_1, %c0_2] : memref<128x128xbf16, #tpu.memory_space<vmem>>, vector<128x128xbf16>
    %cst = arith.constant dense<0.000000e+00> : vector<8x128xf32>
    %2 = tpu.matmul %0, %1, %cst {dimension_numbers = #tpu.dot_dimension_numbers<[1], [0], [0], [1], [0, 0, 1, 1], [], []>} : vector<8x128xbf16>, vector<128x128xbf16>, vector<8x128xf32> -> vector<8x128xf32>
    %c0_3 = arith.constant 0 : index
    %c0_4 = arith.constant 0 : index
    %3 = vector.load %arg3[%c0_3, %c0_4] : memref<1x128xf32, #tpu.memory_space<vmem>>, vector<1x128xf32>
    %4 = vector.broadcast %3 : vector<1x128xf32> to vector<8x128xf32>
    %5 = arith.addf %2, %4 : vector<8x128xf32>
    %6 = math.tanh %5 : vector<8x128xf32>
    %cst_5 = arith.constant 1.000000e+00 : f32
    %7 = vector.broadcast %cst_5 : f32 to vector<8x128xf32>
    %8 = arith.addf %6, %7 : vector<8x128xf32>
    %cst_6 = arith.constant 5.000000e-01 : f32
    %9 = vector.broadcast %cst_6 : f32 to vector<8x128xf32>
    %10 = arith.mulf %8, %9 : vector<8x128xf32>
    %11 = arith.truncf %10 : vector<8x128xf32> to vector<8x128xbf16>
    %c0_7 = arith.constant 0 : index
    %c0_8 = arith.constant 0 : index
    %12 = vector.load %arg4[%c0_7, %c0_8] : memref<128x128xbf16, #tpu.memory_space<vmem>>, vector<128x128xbf16>
    %cst_9 = arith.constant dense<0.000000e+00> : vector<8x128xf32>
    %13 = tpu.matmul %11, %12, %cst_9 {dimension_numbers = #tpu.dot_dimension_numbers<[1], [0], [0], [1], [0, 0, 1, 1], [], []>} : vector<8x128xbf16>, vector<128x128xbf16>, vector<8x128xf32> -> vector<8x128xf32>
    %c0_10 = arith.constant 0 : index
    %c0_11 = arith.constant 0 : index
    %14 = vector.load %arg5[%c0_10, %c0_11] : memref<1x128xf32, #tpu.memory_space<vmem>>, vector<1x128xf32>
    %15 = vector.broadcast %14 : vector<1x128xf32> to vector<8x128xf32>
    %16 = arith.addf %13, %15 : vector<8x128xf32>
    %17 = math.tanh %16 : vector<8x128xf32>
    %cst_12 = arith.constant 1.000000e+00 : f32
    %18 = vector.broadcast %cst_12 : f32 to vector<8x128xf32>
    %19 = arith.addf %17, %18 : vector<8x128xf32>
    %cst_13 = arith.constant 5.000000e-01 : f32
    %20 = vector.broadcast %cst_13 : f32 to vector<8x128xf32>
    %21 = arith.mulf %19, %20 : vector<8x128xf32>
    %c0_14 = arith.constant 0 : index
    %c0_15 = arith.constant 0 : index
    %22 = vector.load %arg6[%c0_14, %c0_15] : memref<8x128xf32, #tpu.memory_space<vmem>>, vector<8x128xf32>
    tpu.vector_store %arg6[%c0_14, %c0_15], %21 {strides = array<i32>} : memref<8x128xf32, #tpu.memory_space<vmem>>, vector<8x128xf32>,
    return
  }
  func.func @transform_0(%arg0: i32) -> (i32, i32) {
    %c0_i32 = arith.constant 0 : i32
    %c0_i32_0 = arith.constant 0 : i32
    return %arg0, %c0_i32 : i32, i32
  }
  func.func @transform_1(%arg0: i32) -> (i32, i32) {
    %c0_i32 = arith.constant 0 : i32
    %c0_i32_0 = arith.constant 0 : i32
    %c0_i32_1 = arith.constant 0 : i32
    return %c0_i32, %c0_i32_0 : i32, i32
  }
  func.func @transform_2(%arg0: i32) -> (i32, i32) {
    %c0_i32 = arith.constant 0 : i32
    %c0_i32_0 = arith.constant 0 : i32
    %c0_i32_1 = arith.constant 0 : i32
    return %c0_i32, %c0_i32_0 : i32, i32
  }
  func.func @transform_3(%arg0: i32) -> (i32, i32) {
    %c0_i32 = arith.constant 0 : i32
    %c0_i32_0 = arith.constant 0 : i32
    %c0_i32_1 = arith.constant 0 : i32
    return %c0_i32, %c0_i32_0 : i32, i32
  }
  func.func @transform_4(%arg0: i32) -> (i32, i32) {
    %c0_i32 = arith.constant 0 : i32
    %c0_i32_0 = arith.constant 0 : i32
    %c0_i32_1 = arith.constant 0 : i32
    return %c0_i32, %c0_i32_0 : i32, i32
  }
  func.func @transform_5(%arg0: i32) -> (i32, i32) {
    %c0_i32 = arith.constant 0 : i32
    %c0_i32_0 = arith.constant 0 : i32
    return %arg0, %c0_i32 : i32, i32
  }
}

</mosaic_0001>

<llo_original>
// kernel: dense_layer_a_forward.1
$region0: #{dense_layer_a_forward.1}
  #allocation0 [shape = 'u32[]', space=smem, size = 0x4, offset = 0x4, fixed_abs, tag = 'smem constant byte address 0x4 - core index']
  #allocation1 [shape = 'u32[144,128]{1,0:T(1,128)}', space=vmem, size = 0x12000, scoped, tag = 'internal scratch']
  %s0 = inlined_call_operand.hbm [shape: bf16[8,128], index: 0, kind: input, shape index: {}]
  %s1 = inlined_call_operand.hbm [shape: bf16[128,128], index: 1, kind: input, shape index: {}]
  %s2 = inlined_call_operand.hbm [shape: f32[1,128], index: 2, kind: input, shape index: {}]
  %s3 = inlined_call_operand.hbm [shape: bf16[128,128], index: 3, kind: input, shape index: {}]
  %s4 = inlined_call_operand.hbm [shape: f32[1,128], index: 4, kind: input, shape index: {}]
  %s5 = inlined_call_operand.hbm [shape: f32[8,128], index: 5, kind: output, shape index: {}]
  %s6 = sld [smem:[#allocation0]]
  $region50: #{dense_layer_a_forward.1} parent=0
    _
  %s8 = ssub.s32 1, %s6
  %s9 = scalar_select 0, %s8, %s6
  $region1: #{dense_layer_a_forward.1} parent=0
    #allocation2 [shape = 'u8[2048]{0}', space=vmem, size = 0x800, scoped, tag = 'input window, operand 0, single buffered']
    #allocation3 [shape = 's32[1]{0}', space=sflag, size = 0x4, scoped, tag = 'scoped memory for dense_layer_a_forward.1']
    #allocation4 [shape = 's32[1]{0}', space=sflag, size = 0x4, scoped, tag = 'scoped memory for dense_layer_a_forward.1']
    #allocation5 [shape = 'u8[32768]{0}', space=vmem, size = 0x8000, scoped, tag = 'input window, operand 1, single buffered']
    #allocation6 [shape = 's32[1]{0}', space=sflag, size = 0x4, scoped, tag = 'scoped memory for dense_layer_a_forward.1']
    #allocation7 [shape = 'u8[512]{0}', space=vmem, size = 0x400, scoped, tag = 'input window, operand 2, single buffered']
    #allocation8 [shape = 'u8[32768]{0}', space=vmem, size = 0x8000, scoped, tag = 'input window, operand 3, single buffered']
    #allocation9 [shape = 's32[1]{0}', space=sflag, size = 0x4, scoped, tag = 'scoped memory for dense_layer_a_forward.1']
    #allocation10 [shape = 'u8[512]{0}', space=vmem, size = 0x400, scoped, tag = 'input window, operand 4, single buffered']
    #allocation11 [shape = 'u8[4096]{0}', space=vmem, size = 0x1000, scoped, tag = 'output window, operand 0, single buffered']
    %10 = vsyncpa [#allocation3], 0
    %11 = vsyncpa [#allocation6], 0
    %12 = vsyncpa [#allocation9], 0
    %13 = vsyncpa [#allocation4], 0
    // Predicated region
    $region2: #{dense_layer_a_forward.1} parent=1 // pred_check
      _
    $region3: #{dense_layer_a_forward.1} parent=1 // pred_check_branch
      %15 = sbr.rel (0) target = $region5
    $region4: #{dense_layer_a_forward.1} parent=1 // pred_region
      %s17 = ssub.s32 64, 64
      %18 = vsyncadd [#allocation3], %s17
      %s20 = sshll.u32 [#allocation2], 4
      %s21 = int_to_ptr.vmem [resolvable:$true] %s20
      %23 = dma.hbm_to_vmem [thread:$0]  %s0, 64, %s21, [#allocation3]
    $region5: #{dense_layer_a_forward.1} parent=1 // pred_fallthru
      _
    // Predicated region
    $region6: #{dense_layer_a_forward.1} parent=1 // pred_check
      _
    $region7: #{dense_layer_a_forward.1} parent=1 // pred_check_branch
      %25 = sbr.rel (0) target = $region9
    $region8: #{dense_layer_a_forward.1} parent=1 // pred_region
      %s27 = ssub.s32 1024, 1024
      %28 = vsyncadd [#allocation6], %s27
      %s29 = sshll.u32 [#allocation5], 4
      %s30 = int_to_ptr.vmem [resolvable:$true] %s29
      %35 = dma.hbm_to_vmem [thread:$0]  %s1, 1024, %s30, [#allocation6], 64, 64, 4
    $region9: #{dense_layer_a_forward.1} parent=1 // pred_fallthru
      _
    // Predicated region
    $region10: #{dense_layer_a_forward.1} parent=1 // pred_check
      _
    $region11: #{dense_layer_a_forward.1} parent=1 // pred_check_branch
      %37 = sbr.rel (0) target = $region13
    $region12: #{dense_layer_a_forward.1} parent=1 // pred_region
      %s39 = ssub.s32 16, 16
      %40 = vsyncadd [#allocation6], %s39
      %s42 = sshll.u32 [#allocation7], 4
      %s43 = int_to_ptr.vmem [resolvable:$true] %s42
      %45 = dma.hbm_to_vmem [thread:$0]  %s2, 16, %s43, [#allocation6]
    $region13: #{dense_layer_a_forward.1} parent=1 // pred_fallthru
      _
    // Predicated region
    $region14: #{dense_layer_a_forward.1} parent=1 // pred_check
      _
    $region15: #{dense_layer_a_forward.1} parent=1 // pred_check_branch
      %47 = sbr.rel (0) target = $region17
    $region16: #{dense_layer_a_forward.1} parent=1 // pred_region
      %s49 = ssub.s32 1024, 1024
      %50 = vsyncadd [#allocation9], %s49
      %s51 = sshll.u32 [#allocation8], 4
      %s52 = int_to_ptr.vmem [resolvable:$true] %s51
      %57 = dma.hbm_to_vmem [thread:$0]  %s3, 1024, %s52, [#allocation9], 64, 64, 4
    $region17: #{dense_layer_a_forward.1} parent=1 // pred_fallthru
      _
    // Predicated region
    $region18: #{dense_layer_a_forward.1} parent=1 // pred_check
      _
    $region19: #{dense_layer_a_forward.1} parent=1 // pred_check_branch
      %59 = sbr.rel (0) target = $region21
    $region20: #{dense_layer_a_forward.1} parent=1 // pred_region
      %s61 = ssub.s32 16, 16
      %62 = vsyncadd [#allocation9], %s61
      %s64 = sshll.u32 [#allocation10], 4
      %s65 = int_to_ptr.vmem [resolvable:$true] %s64
      %67 = dma.hbm_to_vmem [thread:$0]  %s4, 16, %s65, [#allocation9]
    $region21: #{dense_layer_a_forward.1} parent=1 // pred_fallthru
      _
    // Predicated region
    $region22: #{dense_layer_a_forward.1} parent=1 // pred_check
      _
    $region23: #{dense_layer_a_forward.1} parent=1 // pred_check_branch
      %69 = sbr.rel (0) target = $region25
    $region24: #{dense_layer_a_forward.1} parent=1 // pred_region
      %70 = dma.done [#allocation3], 64
    $region25: #{dense_layer_a_forward.1} parent=1 // pred_fallthru
      _
    // Predicated region
    $region26: #{dense_layer_a_forward.1} parent=1 // pred_check
      _
    $region27: #{dense_layer_a_forward.1} parent=1 // pred_check_branch
      %72 = sbr.rel (0) target = $region29
    $region28: #{dense_layer_a_forward.1} parent=1 // pred_region
      %73 = dma.done [#allocation6], 1024
    $region29: #{dense_layer_a_forward.1} parent=1 // pred_fallthru
      _
    // Predicated region
    $region30: #{dense_layer_a_forward.1} parent=1 // pred_check
      _
    $region31: #{dense_layer_a_forward.1} parent=1 // pred_check_branch
      %75 = sbr.rel (0) target = $region33
    $region32: #{dense_layer_a_forward.1} parent=1 // pred_region
      %76 = dma.done [#allocation6], 16
    $region33: #{dense_layer_a_forward.1} parent=1 // pred_fallthru
      _
    // Predicated region
    $region34: #{dense_layer_a_forward.1} parent=1 // pred_check
      _
    $region35: #{dense_layer_a_forward.1} parent=1 // pred_check_branch
      %78 = sbr.rel (0) target = $region37
    $region36: #{dense_layer_a_forward.1} parent=1 // pred_region
      %79 = dma.done [#allocation9], 1024
    $region37: #{dense_layer_a_forward.1} parent=1 // pred_fallthru
      _
    // Predicated region
    $region38: #{dense_layer_a_forward.1} parent=1 // pred_check
      _
    $region39: #{dense_layer_a_forward.1} parent=1 // pred_check_branch
      %81 = sbr.rel (0) target = $region41
    $region40: #{dense_layer_a_forward.1} parent=1 // pred_region
      %82 = dma.done [#allocation9], 16
    $region41: #{dense_layer_a_forward.1} parent=1 // pred_fallthru
      _
    %v84 = vld [vmem:[#allocation2] sm:$0xf]
    %v85 = vld [vmem:[#allocation5] sm:$0xf]
    %v86 = vld [vmem:[#allocation5 + $0x4] sm:$0xf]
    %v87 = vld [vmem:[#allocation5 + $0x8] sm:$0xf]
    %v88 = vld [vmem:[#allocation5 + $0xc] sm:$0xf]
    %v89 = vld [vmem:[#allocation5 + $0x10] sm:$0xf]
    %v90 = vld [vmem:[#allocation5 + $0x14] sm:$0xf]
    %v91 = vld [vmem:[#allocation5 + $0x18] sm:$0xf]
    %v92 = vld [vmem:[#allocation5 + $0x1c] sm:$0xf]
    %v93 = vld [vmem:[#allocation5 + $0x20] sm:$0xf]
    %v94 = vld [vmem:[#allocation5 + $0x24] sm:$0xf]
    %v95 = vld [vmem:[#allocation5 + $0x28] sm:$0xf]
    %v96 = vld [vmem:[#allocation5 + $0x2c] sm:$0xf]
    %v97 = vld [vmem:[#allocation5 + $0x30] sm:$0xf]
    %v98 = vld [vmem:[#allocation5 + $0x34] sm:$0xf]
    %v99 = vld [vmem:[#allocation5 + $0x38] sm:$0xf]
    %v100 = vld [vmem:[#allocation5 + $0x3c] sm:$0xf]
    %v101 = vld [vmem:[#allocation7] sm:$0x1]
    %v103 = vlaneseq
    %v104 = vshrl.u32 %v103, 7
    %v105 = vsub.s32 0, %v104
    %v106 = vrot.slane %v101, %v105
    %v124 = vunpack.c.l.b16 %v85
    %v125 = vunpack.c.l.b16 %v86
    %v126 = vunpack.c.l.b16 %v87
    %v127 = vunpack.c.l.b16 %v88
    %v128 = vunpack.c.l.b16 %v89
    %v129 = vunpack.c.l.b16 %v90
    %v130 = vunpack.c.l.b16 %v91
    %v131 = vunpack.c.l.b16 %v92
    %v132 = vunpack.c.l.b16 %v93
    %v133 = vunpack.c.l.b16 %v94
    %v134 = vunpack.c.l.b16 %v95
    %v135 = vunpack.c.l.b16 %v96
    %v136 = vunpack.c.l.b16 %v97
    %v137 = vunpack.c.l.b16 %v98
    %v138 = vunpack.c.l.b16 %v99
    %v139 = vunpack.c.l.b16 %v100
    %v140 = vpack.c.b16 %v125, %v124
    %v141 = vpack.c.b16 %v127, %v126
    %v142 = vpack.c.b16 %v129, %v128
    %v143 = vpack.c.b16 %v131, %v130
    %v144 = vpack.c.b16 %v133, %v132
    %v145 = vpack.c.b16 %v135, %v134
    %v146 = vpack.c.b16 %v137, %v136
    %v147 = vpack.c.b16 %v139, %v138
    %156 = vmatprep.subr.bf16.mxu0 0
    %157 = vmatpush1.bf16.msra.mxu0 %v140
    %158 = vmatprep.subr.bf16.mxu0 0
    %159 = vmatpush1.bf16.msra.mxu0 %v141
    %160 = vmatprep.subr.bf16.mxu0 0
    %161 = vmatpush1.bf16.msra.mxu0 %v142
    %162 = vmatprep.subr.bf16.mxu0 0
    %163 = vmatpush1.bf16.msra.mxu0 %v143
    %164 = vmatprep.subr.bf16.mxu0 0
    %165 = vmatpush1.bf16.msra.mxu0 %v144
    %166 = vmatprep.subr.bf16.mxu0 0
    %167 = vmatpush1.bf16.msra.mxu0 %v145
    %168 = vmatprep.subr.bf16.mxu0 0
    %169 = vmatpush1.bf16.msra.mxu0 %v146
    %170 = vmatprep.subr.bf16.mxu0 0
    %171 = vmatpush1.bf16.msra.mxu0 %v147
    %172 = vmatprep.subr.bf16.mxu0 0
    %173 = vmatpush1.bf16.msra.mxu0 0
    %174 = vmatprep.subr.bf16.mxu0 0
    %175 = vmatpush1.bf16.msra.mxu0 0
    %176 = vmatprep.subr.bf16.mxu0 0
    %177 = vmatpush1.bf16.msra.mxu0 0
    %178 = vmatprep.subr.bf16.mxu0 0
    %179 = vmatpush1.bf16.msra.mxu0 0
    %180 = vmatprep.subr.bf16.mxu0 0
    %181 = vmatpush1.bf16.msra.mxu0 0
    %182 = vmatprep.subr.bf16.mxu0 0
    %183 = vmatpush1.bf16.msra.mxu0 0
    %184 = vmatprep.subr.bf16.mxu0 0
    %185 = vmatpush1.bf16.msra.mxu0 0
    %186 = vmatprep.subr.bf16.mxu0 0
    %187 = vmatpush1.bf16.msra.mxu0 0
    %188 = vmatprep.mubr.bf16.mxu0 0
    %189 = vmatmul.mubr.bf16.gmra.mrb[0].mxu0 %v84
    %v190 = vpop.f32.mrb[0].mxu0
    %v191 = vadd.f32 %v106, %v190
    %v192 = vpop.f32.mrb[0].mxu0
    %v193 = vpop.f32.mrb[0].mxu0
    %v194 = vpop.f32.mrb[0].mxu0
    %195 = vdwg.mxu0
    %v196 = vtanh.pop %v191
    %v197 = vadd.f32 %v196, 1.0
    %v198 = vmul.f32 %v197, 0.5
    %v199 = vpack.c.bf16 %v198, %v198
    %v200 = vld [vmem:[#allocation8] sm:$0xf]
    %v201 = vld [vmem:[#allocation8 + $0x4] sm:$0xf]
    %v202 = vld [vmem:[#allocation8 + $0x8] sm:$0xf]
    %v203 = vld [vmem:[#allocation8 + $0xc] sm:$0xf]
    %v204 = vld [vmem:[#allocation8 + $0x10] sm:$0xf]
    %v205 = vld [vmem:[#allocation8 + $0x14] sm:$0xf]
    %v206 = vld [vmem:[#allocation8 + $0x18] sm:$0xf]
    %v207 = vld [vmem:[#allocation8 + $0x1c] sm:$0xf]
    %v208 = vld [vmem:[#allocation8 + $0x20] sm:$0xf]
    %v209 = vld [vmem:[#allocation8 + $0x24] sm:$0xf]
    %v210 = vld [vmem:[#allocation8 + $0x28] sm:$0xf]
    %v211 = vld [vmem:[#allocation8 + $0x2c] sm:$0xf]
    %v212 = vld [vmem:[#allocation8 + $0x30] sm:$0xf]
    %v213 = vld [vmem:[#allocation8 + $0x34] sm:$0xf]
    %v214 = vld [vmem:[#allocation8 + $0x38] sm:$0xf]
    %v215 = vld [vmem:[#allocation8 + $0x3c] sm:$0xf]
    %v216 = vld [vmem:[#allocation10] sm:$0x1]
    %v218 = vlaneseq
    %v219 = vshrl.u32 %v218, 7
    %v220 = vsub.s32 0, %v219
    %v221 = vrot.slane %v216, %v220
    %v239 = vunpack.c.l.b16 %v200
    %v240 = vunpack.c.l.b16 %v201
    %v241 = vunpack.c.l.b16 %v202
    %v242 = vunpack.c.l.b16 %v203
    %v243 = vunpack.c.l.b16 %v204
    %v244 = vunpack.c.l.b16 %v205
    %v245 = vunpack.c.l.b16 %v206
    %v246 = vunpack.c.l.b16 %v207
    %v247 = vunpack.c.l.b16 %v208
    %v248 = vunpack.c.l.b16 %v209
    %v249 = vunpack.c.l.b16 %v210
    %v250 = vunpack.c.l.b16 %v211
    %v251 = vunpack.c.l.b16 %v212
    %v252 = vunpack.c.l.b16 %v213
    %v253 = vunpack.c.l.b16 %v214
    %v254 = vunpack.c.l.b16 %v215
    %v255 = vpack.c.b16 %v240, %v239
    %v256 = vpack.c.b16 %v242, %v241
    %v257 = vpack.c.b16 %v244, %v243
    %v258 = vpack.c.b16 %v246, %v245
    %v259 = vpack.c.b16 %v248, %v247
    %v260 = vpack.c.b16 %v250, %v249
    %v261 = vpack.c.b16 %v252, %v251
    %v262 = vpack.c.b16 %v254, %v253
    %271 = vmatprep.subr.bf16.mxu0 0
    %272 = vmatpush1.bf16.msra.mxu0 %v255
    %273 = vmatprep.subr.bf16.mxu0 0
    %274 = vmatpush1.bf16.msra.mxu0 %v256
    %275 = vmatprep.subr.bf16.mxu0 0
    %276 = vmatpush1.bf16.msra.mxu0 %v257
    %277 = vmatprep.subr.bf16.mxu0 0
    %278 = vmatpush1.bf16.msra.mxu0 %v258
    %279 = vmatprep.subr.bf16.mxu0 0
    %280 = vmatpush1.bf16.msra.mxu0 %v259
    %281 = vmatprep.subr.bf16.mxu0 0
    %282 = vmatpush1.bf16.msra.mxu0 %v260
    %283 = vmatprep.subr.bf16.mxu0 0
    %284 = vmatpush1.bf16.msra.mxu0 %v261
    %285 = vmatprep.subr.bf16.mxu0 0
    %286 = vmatpush1.bf16.msra.mxu0 %v262
    %287 = vmatprep.subr.bf16.mxu0 0
    %288 = vmatpush1.bf16.msra.mxu0 0
    %289 = vmatprep.subr.bf16.mxu0 0
    %290 = vmatpush1.bf16.msra.mxu0 0
    %291 = vmatprep.subr.bf16.mxu0 0
    %292 = vmatpush1.bf16.msra.mxu0 0
    %293 = vmatprep.subr.bf16.mxu0 0
    %294 = vmatpush1.bf16.msra.mxu0 0
    %295 = vmatprep.subr.bf16.mxu0 0
    %296 = vmatpush1.bf16.msra.mxu0 0
    %297 = vmatprep.subr.bf16.mxu0 0
    %298 = vmatpush1.bf16.msra.mxu0 0
    %299 = vmatprep.subr.bf16.mxu0 0
    %300 = vmatpush1.bf16.msra.mxu0 0
    %301 = vmatprep.subr.bf16.mxu0 0
    %302 = vmatpush1.bf16.msra.mxu0 0
    %303 = vmatprep.mubr.bf16.mxu0 0
    %304 = vmatmul.mubr.bf16.gmra.mrb[0].mxu0 %v199
    %v305 = vpop.f32.mrb[0].mxu0
    %v306 = vadd.f32 %v221, %v305
    %v307 = vpop.f32.mrb[0].mxu0
    %v308 = vpop.f32.mrb[0].mxu0
    %v309 = vpop.f32.mrb[0].mxu0
    %310 = vdwg.mxu0
    %v311 = vtanh.pop %v306
    %v312 = vadd.f32 %v311, 1.0
    %v313 = vmul.f32 %v312, 0.5
    %314 = vst [vmem:[#allocation11] sm:$0xff] %v313
    // Predicated region
    $region42: #{dense_layer_a_forward.1} parent=1 // pred_check
      _
    $region43: #{dense_layer_a_forward.1} parent=1 // pred_check_branch
      %316 = sbr.rel (0) target = $region45
    $region44: #{dense_layer_a_forward.1} parent=1 // pred_region
      %s318 = ssub.s32 128, 128
      %319 = vsyncadd [#allocation4], %s318
      %s321 = sshll.u32 [#allocation11], 4
      %s322 = int_to_ptr.vmem [resolvable:$true] %s321
      %324 = dma.vmem_to_hbm [thread:$0]  %s322, 128, %s5, [#allocation4]
    $region45: #{dense_layer_a_forward.1} parent=1 // pred_fallthru
      _
    // Predicated region
    $region46: #{dense_layer_a_forward.1} parent=1 // pred_check
      _
    $region47: #{dense_layer_a_forward.1} parent=1 // pred_check_branch
      %326 = sbr.rel (0) target = $region49
    $region48: #{dense_layer_a_forward.1} parent=1 // pred_region
      %327 = dma.done [#allocation4], 128
    $region49: #{dense_layer_a_forward.1} parent=1 // pred_fallthru
      _
    %328 = vsyncpa [#allocation3], 1
    %329 = vsyncpa [#allocation6], 1
    %330 = vsyncpa [#allocation9], 1
    %331 = vsyncpa [#allocation4], 1

</llo_original>
